<compile_context>
chip_gen: v7x
topology: tpu7x:2x2x1
jax: 0.10.0
libtpu: 0.0.40
codegen_flags: <defaults>
</compile_context>

<pallas_src>
from functools import partial

import jax
import jax.numpy as jnp
from jax import lax
from jax.experimental import pallas as pl
from jax.experimental.pallas import tpu as pltpu


# ----------------------------------------------------------------------------
# helpers
# ----------------------------------------------------------------------------
def _round_up(n, m):
    return ((n + m - 1) // m) * m


def _pick_time_chunk(T, max_chunk=32):
    """Largest divisor of T that is <= max_chunk (amortizes per-grid-step overhead)."""
    for c in range(min(T, max_chunk), 0, -1):
        if T % c == 0:
            return c
    return 1


def _pick_row_tile(M, cap=1024):
    """Row tile for the input projection that avoids any pad+slice HBM copies.

    Returns M itself when it fits a single block, else the largest 8-aligned divisor
    of M up to `cap`, else None (caller falls back to padding).
    """
    if M <= cap:
        return M
    for tm in range(cap - cap % 8, 7, -8):
        if M % tm == 0:
            return tm
    return None


def _keep_mask_f32(bits_u32, p):
    """Bernoulli(1-p) keep mask from raw uint32 bits via integer-threshold compare.

    Shared by the kernel and the pure-JAX reference so the masks match exactly.
    """
    thresh = min(int((1.0 - float(p)) * 2147483648.0), 2147483647)  # (1-p) * 2^31
    return ((bits_u32 >> 1).astype(jnp.int32) < jnp.int32(thresh)).astype(jnp.float32)


# ----------------------------------------------------------------------------
# Kernel 0 (one-shot): WeightDrop prep of the recurrent weight.
#   Input  : W_hh^T (H, 4H) f32 (transposed once on the host), dropout bits (H, 4H) u32
#   Output : masked, 1/(1-p)-scaled, g-columns-x2, bf16 (H, 4H) weight for the MXU.
# ----------------------------------------------------------------------------
def _prep_whh_kernel(whh_t_ref, bits_ref, out_ref, *, p):
    w = whh_t_ref[...]                                        # (H, 4H) f32
    if p >= 1.0:                                              # static python branch
        w = jnp.zeros_like(w)
    elif p > 0.0:
        keep = _keep_mask_f32(bits_ref[...], p)               # integer-threshold compare
        w = w * keep * (1.0 / (1.0 - p))                      # inverted dropout
    H4 = w.shape[1]
    H = H4 // 4
    col = lax.broadcasted_iota(jnp.int32, w.shape, dimension=1)
    w = jnp.where((col >= 2 * H) & (col < 3 * H), w * 2.0, w)  # x2 on g columns (one-time)
    out_ref[...] = w.astype(out_ref.dtype)


def prep_whh(w_hh_t_raw_f32, bits_u32, p):
    H, H4 = w_hh_t_raw_f32.shape
    return pl.pallas_call(
        partial(_prep_whh_kernel, p=float(p)),
        out_shape=jax.ShapeDtypeStruct((H, H4), jnp.bfloat16),
        grid=(1,),
        in_specs=[
            pl.BlockSpec((H, H4), lambda i: (0, 0)),
            pl.BlockSpec((H, H4), lambda i: (0, 0)),
        ],
        out_specs=pl.BlockSpec((H, H4), lambda i: (0, 0)),
    )(w_hh_t_raw_f32, bits_u32)


# ----------------------------------------------------------------------------
# Kernel 1: input projection  gates_x = x @ W_ih^T + (b_ih + b_hh)
#           (g-gate columns are pre-scaled x2 on the HOST; bf16 MXU operands, f32 accumulate;
#            bf16 output to halve the gates_x HBM round trip)
# ----------------------------------------------------------------------------
def _input_proj_kernel(x_ref, wih_t_ref, b_ref, out_ref):
    gx = jnp.dot(x_ref[...], wih_t_ref[...],
                 preferred_element_type=jnp.float32) + b_ref[...]   # (tm, 4H) f32
    out_ref[...] = gx.astype(out_ref.dtype)                         # bf16 store


def input_projection(x, w_ih_t_bf16, bias_f32):
    T, B, I = x.shape
    H4 = w_ih_t_bf16.shape[1]
    M = T * B
    x2d = x.reshape(M, I).astype(jnp.bfloat16)

    tm = _pick_row_tile(M)
    if tm is None:
        # Rare fallback (huge M with no 8-aligned divisor): pad rows.
        tm = 512
        M_pad = _round_up(M, tm)
        x2d = jnp.pad(x2d, ((0, M_pad - M), (0, 0)))
    else:
        M_pad = M

    out = pl.pallas_call(
        _input_proj_kernel,
        out_shape=jax.ShapeDtypeStruct((M_pad, H4), jnp.bfloat16),
        grid=(M_pad // tm,),
        in_specs=[
            pl.BlockSpec((tm, I), lambda m: (m, 0)),
            pl.BlockSpec((I, H4), lambda m: (0, 0)),
            pl.BlockSpec((1, H4), lambda m: (0, 0)),
        ],
        out_specs=pl.BlockSpec((tm, H4), lambda m: (m, 0)),
        compiler_params=pltpu.CompilerParams(
            dimension_semantics=("parallel",)),    # GEMM phase: megacore-shardable
    )(x2d, w_ih_t_bf16, bias_f32)
    if M_pad != M:
        out = out[:M]
    return out.reshape(T, B, H4)


# ----------------------------------------------------------------------------
# Kernel 2: LSTM recurrence, time-chunked.
#   chunk == 0 prologue: zero-init of the persistent h / c scratch.
#   every chunk: unrolled inner loop over Tc timesteps; only h @ W_hh^T on the MXU
#   (bf16 operands, f32 accumulate); single sigmoid over the contiguous (B, 4H) slab,
#   g-gate reconstructed as 2*sigmoid(2z)-1 == tanh(z).
# ----------------------------------------------------------------------------
def _lstm_recurrence_kernel(gx_ref, whh_t_ref, out_ref, h_sc, c_sc):
    H = h_sc.shape[-1]
    Tc = gx_ref.shape[0]

    @pl.when(pl.program_id(0) == 0)
    def _init():
        h_sc[...] = jnp.zeros_like(h_sc)
        c_sc[...] = jnp.zeros_like(c_sc)

    w_hh_t = whh_t_ref[...]                                   # (H, 4H) bf16, resident in VMEM

    def step(s, carry):
        h, c = carry
        gates = gx_ref[s].astype(jnp.float32) + jnp.dot(
            h.astype(jnp.bfloat16), w_hh_t,
            preferred_element_type=jnp.float32)               # (B, 4H); g cols hold 2*z_g
        sg = jax.nn.sigmoid(gates)                            # one EUP stream over the slab
        i_g = sg[:, 0 * H:1 * H]
        f_g = sg[:, 1 * H:2 * H]
        g_g = 2.0 * sg[:, 2 * H:3 * H] - 1.0                  # == tanh(z_g) exactly
        o_g = sg[:, 3 * H:4 * H]
        c_new = f_g * c + i_g * g_g
        h_new = o_g * jnp.tanh(c_new)
        out_ref[s] = h_new.astype(out_ref.dtype)              # store into the (Tc,B,H) VMEM block
        return h_new, c_new

    # TODO(synk): for very large B*4H, switch to a partial unroll if vreg spills show up.
    h_f, c_f = lax.fori_loop(0, Tc, step, (h_sc[...], c_sc[...]), unroll=True)
    h_sc[...] = h_f
    c_sc[...] = c_f


def lstm_recurrence(gates_x, w_hh_t_bf16):
    T, B, H4 = gates_x.shape
    H = H4 // 4
    Tc = _pick_time_chunk(T)

    return pl.pallas_call(
        _lstm_recurrence_kernel,
        out_shape=jax.ShapeDtypeStruct((T, B, H), jnp.float32),
        grid=(T // Tc,),
        in_specs=[
            pl.BlockSpec((Tc, B, H4), lambda c: (c, 0, 0)),   # precomputed input gates (bf16)
            pl.BlockSpec((H, H4), lambda c: (0, 0)),          # dropped, transposed W_hh (bf16)
        ],
        out_specs=pl.BlockSpec((Tc, B, H), lambda c: (c, 0, 0)),
        scratch_shapes=[
            pltpu.VMEM((B, H), jnp.float32),                  # h_t
            pltpu.VMEM((B, H), jnp.float32),                  # c_t
        ],
        compiler_params=pltpu.CompilerParams(
            dimension_semantics=("arbitrary",)),              # recurrence: must run in order
    )(gates_x, w_hh_t_bf16)


# ----------------------------------------------------------------------------
# WeightDrop(LSTM) forward
# ----------------------------------------------------------------------------
def weight_drop_lstm_forward(x, params, dropout_p, seed, training=True):
    """WeightDrop._setweights() (drop weight_hh_l0_raw) followed by LSTM.forward(x)."""
    w_ih, w_hh_raw, b_ih, b_hh = params
    H4, H = w_hh_raw.shape

    p = float(dropout_p) if (training and float(dropout_p) > 0.0) else 0.0

    # --- one-time host-side prep (tiny XLA ops): transpose, fold g-gate x2, bf16 cast ---
    col = jnp.arange(H4)
    gscale = jnp.where((col >= 2 * H) & (col < 3 * H), 2.0, 1.0).astype(jnp.float32)

    w_ih_t = (jnp.transpose(w_ih).astype(jnp.float32) * gscale[None, :]).astype(jnp.bfloat16)
    bias = ((b_ih + b_hh).astype(jnp.float32) * gscale).reshape(1, H4)        # f32, added in-kernel

    w_hh_t_raw = jnp.transpose(w_hh_raw).astype(jnp.float32)                  # (H, 4H)
    if p > 0.0:
        # Host-side uint32 bits (portable: pltpu.prng_* has no CPU/interpret lowering);
        # the mask itself is applied in the one-shot Pallas prep kernel.
        bits = jax.random.bits(jax.random.PRNGKey(seed), (H, H4), dtype=jnp.uint32)
    else:
        bits = jnp.zeros((H, H4), dtype=jnp.uint32)
    w_hh_t = prep_whh(w_hh_t_raw, bits, p)                                    # (H, 4H) bf16

    # Hoisted input projection: one big (T*B, I) @ (I, 4H) matmul outside the recurrence.
    gates_x = input_projection(x, w_ih_t, bias)                               # (T, B, 4H) bf16

    return lstm_recurrence(gates_x, w_hh_t)


# ----------------------------------------------------------------------------
# pure-JAX reference (for a tolerance check)
# ----------------------------------------------------------------------------
def _lstm_reference(x, w_ih, w_hh, b_ih, b_hh):
    B = x.shape[1]
    H = w_hh.shape[1]

    def step(carry, x_t):
        h, c = carry
        g = x_t @ w_ih.T + h @ w_hh.T + b_ih + b_hh
        i = jax.nn.sigmoid(g[:, 0 * H:1 * H])
        f = jax.nn.sigmoid(g[:, 1 * H:2 * H])
        gg = jnp.tanh(g[:, 2 * H:3 * H])
        o = jax.nn.sigmoid(g[:, 3 * H:4 * H])
        c = f * c + i * gg
        h = o * jnp.tanh(c)
        return (h, c), h

    init = (jnp.zeros((B, H), jnp.float32), jnp.zeros((B, H), jnp.float32))
    _, ys = lax.scan(step, init, x)
    return ys


if __name__ == "__main__":
    T, B, I, H = 8, 4, 16, 32
    dropout_p = 0.5
    seed = 1234

    key = jax.random.PRNGKey(0)
    k_x, k_wih, k_whh, k_bih, k_bhh = jax.random.split(key, 5)
    bound = 1.0 / (H ** 0.5)   # PyTorch LSTM default init: U(-1/sqrt(H), 1/sqrt(H))

    x = jax.random.normal(k_x, (T, B, I), dtype=jnp.float32)
    w_ih = jax.random.uniform(k_wih, (4 * H, I), minval=-bound, maxval=bound, dtype=jnp.float32)
    w_hh_raw = jax.random.uniform(k_whh, (4 * H, H), minval=-bound, maxval=bound, dtype=jnp.float32)
    b_ih = jax.random.uniform(k_bih, (4 * H,), minval=-bound, maxval=bound, dtype=jnp.float32)
    b_hh = jax.random.uniform(k_bhh, (4 * H,), minval=-bound, maxval=bound, dtype=jnp.float32)

    out = weight_drop_lstm_forward(
        x, (w_ih, w_hh_raw, b_ih, b_hh), dropout_p, seed=seed, training=True
    )
    out = jax.block_until_ready(out)
    assert out.shape == (T, B, H) and out.dtype == jnp.float32

    # Reference with the identical dropout mask (bits generated in the transposed (H, 4H) layout).
    bits = jax.random.bits(jax.random.PRNGKey(seed), (H, 4 * H), dtype=jnp.uint32)
    keep_t = _keep_mask_f32(bits, dropout_p)                    # (H, 4H)
    w_hh_dropped = w_hh_raw * keep_t.T * (1.0 / (1.0 - dropout_p))
    ref = _lstm_reference(x, w_ih, w_hh_dropped, b_ih, b_hh)

    # bf16 MXU operands / bf16 gates_x storage trade ~1e-2 abs error vs the pure-f32 reference;
    # gate element-wise math stays f32, so 5e-2 is a comfortable bound at these magnitudes.
    err = float(jnp.max(jnp.abs(out - ref)))
    assert err < 5e-2, f"max abs err vs reference: {err}"

    print("KERNEL_OK")
</pallas_src>

<mosaic_0001>
module attributes {stable_mosaic.version = 11 : i64} {
  func.func @_prep_whh_kernel(%arg0: i32, %arg1: memref<32x128xf32, #tpu.memory_space<vmem>>, %arg2: memref<32x128xi32, #tpu.memory_space<vmem>>, %arg3: memref<32x128xbf16, #tpu.memory_space<vmem>>) attributes {dimension_semantics = [#tpu.dimension_semantics<arbitrary>], iteration_bounds = array<i64: 1>, scalar_prefetch = 0 : i64, scratch_operands = 0 : i64, tpu.core_type = #tpu.core_type<tc>, window_params = [{pipeline_mode = #tpu.pipeline_mode<synchronous>, transform_indices = @transform_0, window_bounds = array<i64: 32, 128>}, {pipeline_mode = #tpu.pipeline_mode<synchronous>, transform_indices = @transform_1, window_bounds = array<i64: 32, 128>}, {pipeline_mode = #tpu.pipeline_mode<synchronous>, transform_indices = @transform_2, window_bounds = array<i64: 32, 128>}]} {
    %c0 = arith.constant 0 : index
    %c0_0 = arith.constant 0 : index
    %0 = vector.load %arg1[%c0, %c0_0] : memref<32x128xf32, #tpu.memory_space<vmem>>, vector<32x128xf32>
    %c0_1 = arith.constant 0 : index
    %c0_2 = arith.constant 0 : index
    %1 = vector.load %arg2[%c0_1, %c0_2] : memref<32x128xi32, #tpu.memory_space<vmem>>, vector<32x128xi32>
    %c1_i32 = arith.constant 1 : i32
    %2 = vector.broadcast %c1_i32 : i32 to vector<32x128xi32>
    %3 = arith.shrui %1, %2 : vector<32x128xi32>
    %c1073741824_i32 = arith.constant 1073741824 : i32
    %4 = vector.broadcast %c1073741824_i32 : i32 to vector<32x128xi32>
    %5 = arith.cmpi slt, %3, %4 : vector<32x128xi32>
    %6 = arith.extui %5 : vector<32x128xi1> to vector<32x128xi32>
    %7 = arith.sitofp %6 : vector<32x128xi32> to vector<32x128xf32>
    %8 = arith.mulf %0, %7 : vector<32x128xf32>
    %cst = arith.constant 2.000000e+00 : f32
    %9 = vector.broadcast %cst : f32 to vector<32x128xf32>
    %10 = arith.mulf %8, %9 : vector<32x128xf32>
    %11 = tpu.iota {dimensions = array<i32: 1>} : vector<32x128xi32>
    %c64_i32 = arith.constant 64 : i32
    %12 = vector.broadcast %c64_i32 : i32 to vector<32x128xi32>
    %13 = arith.cmpi sge, %11, %12 : vector<32x128xi32>
    %c96_i32 = arith.constant 96 : i32
    %14 = vector.broadcast %c96_i32 : i32 to vector<32x128xi32>
    %15 = arith.cmpi slt, %11, %14 : vector<32x128xi32>
    %16 = arith.andi %13, %15 : vector<32x128xi1>
    %cst_3 = arith.constant 2.000000e+00 : f32
    %17 = vector.broadcast %cst_3 : f32 to vector<32x128xf32>
    %18 = arith.mulf %10, %17 : vector<32x128xf32>
    %19 = arith.select %16, %18, %10 : vector<32x128xi1>, vector<32x128xf32>
    %20 = arith.truncf %19 : vector<32x128xf32> to vector<32x128xbf16>
    %c0_4 = arith.constant 0 : index
    %c0_5 = arith.constant 0 : index
    %21 = vector.load %arg3[%c0_4, %c0_5] : memref<32x128xbf16, #tpu.memory_space<vmem>>, vector<32x128xbf16>
    tpu.vector_store %arg3[%c0_4, %c0_5], %20 {strides = array<i32>} : memref<32x128xbf16, #tpu.memory_space<vmem>>, vector<32x128xbf16>,
    return
  }
  func.func @transform_0(%arg0: i32) -> (i32, i32) {
    %c0_i32 = arith.constant 0 : i32
    %c0_i32_0 = arith.constant 0 : i32
    %c0_i32_1 = arith.constant 0 : i32
    return %c0_i32, %c0_i32_0 : i32, i32
  }
  func.func @transform_1(%arg0: i32) -> (i32, i32) {
    %c0_i32 = arith.constant 0 : i32
    %c0_i32_0 = arith.constant 0 : i32
    %c0_i32_1 = arith.constant 0 : i32
    return %c0_i32, %c0_i32_0 : i32, i32
  }
  func.func @transform_2(%arg0: i32) -> (i32, i32) {
    %c0_i32 = arith.constant 0 : i32
    %c0_i32_0 = arith.constant 0 : i32
    %c0_i32_1 = arith.constant 0 : i32
    return %c0_i32, %c0_i32_0 : i32, i32
  }
}

</mosaic_0001>

<llo_original>
// kernel: tpu_custom_call.1
$region0: #{tpu_custom_call.1}
  #allocation0 [shape = 'u32[]', space=smem, size = 0x4, offset = 0x4, fixed_abs, tag = 'smem constant byte address 0x4 - core index']
  #allocation1 [shape = 'u32[144,128]{1,0:T(1,128)}', space=vmem, size = 0x12000, scoped, tag = 'internal scratch']
  %s0 = inlined_call_operand.hbm [shape: f32[32,128], index: 0, kind: input, shape index: {}]
  %s1 = inlined_call_operand.hbm [shape: u32[32,128], index: 1, kind: input, shape index: {}]
  %s2 = inlined_call_operand.hbm [shape: bf16[32,128], index: 2, kind: output, shape index: {}]
  %s3 = sld [smem:[#allocation0]]
  $region26: #{tpu_custom_call.1} parent=0
    _
  %s5 = ssub.s32 1, %s3
  %s6 = scalar_select 0, %s5, %s3
  $region1: #{tpu_custom_call.1} parent=0
    #allocation2 [shape = 'u8[16384]{0}', space=vmem, size = 0x4000, scoped, tag = 'input window, operand 0, single buffered']
    #allocation3 [shape = 's32[1]{0}', space=sflag, size = 0x4, scoped, tag = 'scoped memory for tpu_custom_call.1']
    #allocation4 [shape = 's32[1]{0}', space=sflag, size = 0x4, scoped, tag = 'scoped memory for tpu_custom_call.1']
    #allocation5 [shape = 'u8[16384]{0}', space=vmem, size = 0x4000, scoped, tag = 'input window, operand 1, single buffered']
    #allocation6 [shape = 's32[1]{0}', space=sflag, size = 0x4, scoped, tag = 'scoped memory for tpu_custom_call.1']
    #allocation7 [shape = 'u8[8192]{0}', space=vmem, size = 0x2000, scoped, tag = 'output window, operand 0, single buffered']
    %7 = vsyncpa [#allocation3], 0
    %8 = vsyncpa [#allocation6], 0
    %9 = vsyncpa [#allocation4], 0
    // Predicated region
    $region2: #{tpu_custom_call.1} parent=1 // pred_check
      _
    $region3: #{tpu_custom_call.1} parent=1 // pred_check_branch
      %11 = sbr.rel (0) target = $region5
    $region4: #{tpu_custom_call.1} parent=1 // pred_region
      %s13 = ssub.s32 512, 512
      %14 = vsyncadd [#allocation3], %s13
      %s15 = sshll.u32 [#allocation2], 4
      %s16 = int_to_ptr.vmem [resolvable:$true] %s15
      %21 = dma.hbm_to_vmem [thread:$0]  %s0, 512, %s16, [#allocation3], 128, 128, 8
    $region5: #{tpu_custom_call.1} parent=1 // pred_fallthru
      _
    // Predicated region
    $region6: #{tpu_custom_call.1} parent=1 // pred_check
      _
    $region7: #{tpu_custom_call.1} parent=1 // pred_check_branch
      %23 = sbr.rel (0) target = $region9
    $region8: #{tpu_custom_call.1} parent=1 // pred_region
      %s25 = ssub.s32 512, 512
      %26 = vsyncadd [#allocation6], %s25
      %s27 = sshll.u32 [#allocation5], 4
      %s28 = int_to_ptr.vmem [resolvable:$true] %s27
      %33 = dma.hbm_to_vmem [thread:$0]  %s1, 512, %s28, [#allocation6], 128, 128, 8
    $region9: #{tpu_custom_call.1} parent=1 // pred_fallthru
      _
    // Predicated region
    $region10: #{tpu_custom_call.1} parent=1 // pred_check
      _
    $region11: #{tpu_custom_call.1} parent=1 // pred_check_branch
      %35 = sbr.rel (0) target = $region13
    $region12: #{tpu_custom_call.1} parent=1 // pred_region
      %36 = dma.done [#allocation3], 512
    $region13: #{tpu_custom_call.1} parent=1 // pred_fallthru
      _
    // Predicated region
    $region14: #{tpu_custom_call.1} parent=1 // pred_check
      _
    $region15: #{tpu_custom_call.1} parent=1 // pred_check_branch
      %38 = sbr.rel (0) target = $region17
    $region16: #{tpu_custom_call.1} parent=1 // pred_region
      %39 = dma.done [#allocation6], 512
    $region17: #{tpu_custom_call.1} parent=1 // pred_fallthru
      _
    %v40 = vld [vmem:[#allocation2] sm:$0xff]
    %v41 = vld [vmem:[#allocation2 + $0x8] sm:$0xff]
    %v42 = vld [vmem:[#allocation2 + $0x10] sm:$0xff]
    %v43 = vld [vmem:[#allocation2 + $0x18] sm:$0xff]
    %v44 = vld [vmem:[#allocation5] sm:$0xff]
    %v45 = vld [vmem:[#allocation5 + $0x8] sm:$0xff]
    %v46 = vld [vmem:[#allocation5 + $0x10] sm:$0xff]
    %v47 = vld [vmem:[#allocation5 + $0x18] sm:$0xff]
    %v48 = vshrl.u32 %v44, 1
    %v49 = vshrl.u32 %v45, 1
    %v50 = vshrl.u32 %v46, 1
    %v51 = vshrl.u32 %v47, 1
    %vm52 = vcmp.lt.s32.totalorder %v48, 1073741824
    %vm53 = vcmp.lt.s32.totalorder %v49, 1073741824
    %vm54 = vcmp.lt.s32.totalorder %v50, 1073741824
    %vm55 = vcmp.lt.s32.totalorder %v51, 1073741824
    %v56 = vsel %vm52, 1, 0
    %v57 = vsel %vm53, 1, 0
    %v58 = vsel %vm54, 1, 0
    %v59 = vsel %vm55, 1, 0
    %v60 = vcvt.s32.f32 %v56
    %v61 = vcvt.s32.f32 %v57
    %v62 = vcvt.s32.f32 %v58
    %v63 = vcvt.s32.f32 %v59
    %v64 = vmul.f32 %v40, %v60
    %v65 = vmul.f32 %v41, %v61
    %v66 = vmul.f32 %v42, %v62
    %v67 = vmul.f32 %v43, %v63
    %v68 = vmul.f32 %v64, 2.0
    %v69 = vmul.f32 %v65, 2.0
    %v70 = vmul.f32 %v66, 2.0
    %v71 = vmul.f32 %v67, 2.0
    %v72 = vlaneseq
    %v73 = vand.u32 %v72, 127
    %vm74 = vcmp.ge.s32.totalorder %v73, 64
    %vm75 = vcmp.lt.s32.totalorder %v73, 96
    %vm76 = vmand %vm74, %vm75
    %v77 = vmul.f32 %v68, 2.0
    %v78 = vmul.f32 %v69, 2.0
    %v79 = vmul.f32 %v70, 2.0
    %v80 = vmul.f32 %v71, 2.0
    %v81 = vsel %vm76, %v77, %v68
    %v82 = vsel %vm76, %v78, %v69
    %v83 = vsel %vm76, %v79, %v70
    %v84 = vsel %vm76, %v80, %v71
    %v85 = vpack.c.bf16 %v82, %v81
    %v86 = vpack.c.bf16 %v84, %v83
    %v89 = vunpack.c.l.b16 %v85
    %v90 = vunpack.c.h.b16 %v85
    %v91 = vunpack.c.l.b16 %v86
    %v92 = vunpack.c.h.b16 %v86
    %v93 = vpack.c.b16 %v89, %v89
    %v94 = vpack.c.b16 %v90, %v90
    %v95 = vpack.c.b16 %v91, %v91
    %v96 = vpack.c.b16 %v92, %v92
    %101 = vst [vmem:[#allocation7] sm:$0xf] %v93
    %102 = vst [vmem:[#allocation7 + $0x4] sm:$0xf] %v94
    %103 = vst [vmem:[#allocation7 + $0x8] sm:$0xf] %v95
    %104 = vst [vmem:[#allocation7 + $0xc] sm:$0xf] %v96
    // Predicated region
    $region18: #{tpu_custom_call.1} parent=1 // pred_check
      _
    $region19: #{tpu_custom_call.1} parent=1 // pred_check_branch
      %106 = sbr.rel (0) target = $region21
    $region20: #{tpu_custom_call.1} parent=1 // pred_region
      %s108 = ssub.s32 256, 256
      %109 = vsyncadd [#allocation4], %s108
      %s110 = sshll.u32 [#allocation7], 4
      %s111 = int_to_ptr.vmem [resolvable:$true] %s110
      %116 = dma.vmem_to_hbm [thread:$0]  %s111, 256, %s2, [#allocation4], 64, 64, 4
    $region21: #{tpu_custom_call.1} parent=1 // pred_fallthru
      _
    // Predicated region
    $region22: #{tpu_custom_call.1} parent=1 // pred_check
      _
    $region23: #{tpu_custom_call.1} parent=1 // pred_check_branch
      %118 = sbr.rel (0) target = $region25
    $region24: #{tpu_custom_call.1} parent=1 // pred_region
      %119 = dma.done [#allocation4], 256
    $region25: #{tpu_custom_call.1} parent=1 // pred_fallthru
      _
    %120 = vsyncpa [#allocation3], 1
    %121 = vsyncpa [#allocation6], 1
    %122 = vsyncpa [#allocation4], 1

</llo_original>
